<compile_context>
chip_gen: v7x
topology: tpu7x:2x2x1
jax: 0.10.0
libtpu: 0.0.40
codegen_flags: <defaults>
</compile_context>

<pallas_src>
import functools

import numpy as np
import jax
import jax.numpy as jnp
from jax.experimental import pallas as pl
from jax.experimental.pallas import tpu as pltpu


_MIN_GRID_STEPS = 4    # keep >= 2 grid steps per TensorCore on v7x (2 TC/chip)
_VMEM_HEADROOM = 0.8   # leave 20% headroom inside the scoped-VMEM limit


def _round_up(x: int, m: int) -> int:
    return -(-x // m) * m


def _vmem_budget():
    """Returns (vmem_limit_bytes, double-buffered pipeline byte budget)."""
    try:
        cap = int(pltpu.get_tpu_info().vmem_capacity_bytes)
    except Exception:
        cap = 64 << 20                       # conservative: v7x per-TC physical
    # v5e/v6e (128 MiB physical) -> 64 MiB scoped; v7x (64 MiB) -> 32 MiB.
    limit = min(cap // 2, 64 << 20)
    return limit, int(limit * _VMEM_HEADROOM)


def _apply_gamma(t, gamma: float):
    """t**gamma for t >= 0, avoiding the exp/log EUP path for half-int gamma."""
    g2 = gamma * 2.0
    if abs(g2 - round(g2)) < 1e-9 and 0 <= round(g2) <= 16:
        n2 = int(round(g2))
        n_int, has_half = n2 // 2, bool(n2 % 2)
        acc = None
        if n_int > 0:
            acc = t
            for _ in range(n_int - 1):
                acc = acc * t                  # VPU multiplies
        if has_half:
            s = jnp.sqrt(t)                    # single EUP transcendental
            acc = s if acc is None else acc * s
        return acc if acc is not None else jnp.ones_like(t)
    # General gamma: exp/log based pow (t already clamped >= 0 by caller).
    return jnp.power(t, jnp.asarray(gamma, dtype=t.dtype))


def _bam_kernel(img_ref, out_ref, *, gamma: float):
    # img_ref: (1, C, TR, L) or (1, C, TN) block; out_ref: same with C -> 1.
    img = img_ref[...]
    # HSV V channel = max over the RGB channel axis.
    v = jnp.max(img, axis=1, keepdims=True)
    # Clamp so values slightly above 1.0 cannot produce NaN in the power.
    t = jnp.maximum(1.0 - v, 0.0)
    out_ref[...] = _apply_gamma(t, gamma).astype(out_ref.dtype)


def brightness_attention_map(image: jax.Array, gamma: float = 2.5,
                             denoise_ksize=None, out_dtype=None) -> jax.Array:
    """Pallas BAM prior. `image`: [B, 3, H, W] float in [0, 1]."""
    if denoise_ksize is not None:
        # TODO(synk): median blur (kornia.filters.median_blur) not implemented;
        # the module default is denoise_ksize=None.
        raise NotImplementedError("denoise_ksize is not supported")
    gamma = float(gamma)
    if gamma < 0:
        raise ValueError("gamma must be >= 0 (module contract is gamma >= 1)")

    B, C, H, W = image.shape
    N = H * W
    out_dtype = image.dtype if out_dtype is None else jnp.dtype(out_dtype)
    in_isize = image.dtype.itemsize
    out_isize = np.dtype(out_dtype).itemsize

    vmem_limit, pipeline_budget = _vmem_budget()
    kernel = functools.partial(_bam_kernel, gamma=gamma)
    cost = pl.CostEstimate(
        flops=8 * B * N,                            # channel max + clamp + muls
        transcendentals=B * N,                      # one sqrt per output pixel
        bytes_accessed=B * N * (C * in_isize + out_isize),
    )
    make_params = functools.partial(
        pltpu.CompilerParams,
        dimension_semantics=("parallel", "parallel"),
        vmem_limit_bytes=vmem_limit,
    )
    min_tiles = -(-_MIN_GRID_STEPS // B)            # ceil(4 / B)

    if N % 128 == 0:
        # Lane- and sublane-dense layout. NOTE: this reshape is a no-op only
        # for contiguous NCHW input; a transposed producer would force XLA to
        # insert a full copy that dwarfs the kernel itself.
        lane = next(l for l in (1024, 512, 256, 128) if N % l == 0)
        rows = N // lane
        x = image.reshape(B, C, rows, lane)

        # Per step the pipeline double-buffers (C in + 1 out) planes of
        # (tr, lane) elements.
        step_elems_cap = pipeline_budget // (2 * (C + 1) * in_isize)
        if rows <= 8:
            tr, n_tiles = rows, 1
        else:
            tr_cap = max(8, (step_elems_cap // lane) // 8 * 8)
            n_tiles = max(pl.cdiv(rows, tr_cap), min_tiles)   # VMEM + 2-TC busy
            n_tiles = min(n_tiles, pl.cdiv(rows, 8))
            tr = min(tr_cap, _round_up(pl.cdiv(rows, n_tiles), 8))  # balanced
            n_tiles = pl.cdiv(rows, tr)

        out = pl.pallas_call(
            kernel,
            out_shape=jax.ShapeDtypeStruct((B, 1, rows, lane), out_dtype),
            grid_spec=pltpu.PrefetchScalarGridSpec(
                num_scalar_prefetch=0,
                grid=(B, n_tiles),
                in_specs=[pl.BlockSpec((1, C, tr, lane),
                                       lambda b, r: (b, 0, r, 0))],
                out_specs=pl.BlockSpec((1, 1, tr, lane),
                                       lambda b, r: (b, 0, r, 0)),
            ),
            compiler_params=make_params(),
            cost_estimate=cost,
        )(x)
        return out.reshape(B, 1, H, W)

    # Fallback for H*W not a multiple of 128: flat (B, C, N) layout tiled along
    # the last axis in lane-dense multiples of 128 (last tile partial, handled
    # by Pallas boundary masking). No host-side slicing/padding copies; only
    # sublane occupancy is wasted (C=3 of 8 sublanes), which is harmless for a
    # bandwidth-bound kernel.
    x = image.reshape(B, C, N)
    # VMEM tiles pad both the C-plane and the 1-plane to 8 sublanes.
    tn_cap = max(128, (pipeline_budget // (2 * 2 * 8 * in_isize)) // 128 * 128)
    if N <= 128:
        tn, n_tiles = N, 1          # full-extent last dim (< 128 is allowed)
    else:
        n_tiles = max(pl.cdiv(N, tn_cap), min_tiles)
        n_tiles = min(n_tiles, pl.cdiv(N, 128))
        tn = min(tn_cap, _round_up(pl.cdiv(N, n_tiles), 128))
        n_tiles = pl.cdiv(N, tn)

    out = pl.pallas_call(
        kernel,
        out_shape=jax.ShapeDtypeStruct((B, 1, N), out_dtype),
        grid_spec=pltpu.PrefetchScalarGridSpec(
            num_scalar_prefetch=0,
            grid=(B, n_tiles),
            in_specs=[pl.BlockSpec((1, C, tn), lambda b, t: (b, 0, t))],
            out_specs=pl.BlockSpec((1, 1, tn), lambda b, t: (b, 0, t)),
        ),
        compiler_params=make_params(),
        cost_estimate=cost,
    )(x)
    return out.reshape(B, 1, H, W)


class BrightnessAttentionMap:
    """JAX/Pallas port of the PyTorch BrightnessAttentionMap module."""

    def __init__(self, gamma: float = 2.5, denoise_ksize=None):
        self.gamma = gamma
        self.denoise_ksize = denoise_ksize

    def __call__(self, image: jax.Array) -> jax.Array:
        return brightness_attention_map(image, self.gamma, self.denoise_ksize)


if __name__ == "__main__":
    def reference(x, gamma=2.5):
        v = jnp.max(x, axis=1, keepdims=True)
        return jnp.power(jnp.maximum(1.0 - v, 0.0), gamma)

    module = BrightnessAttentionMap(gamma=2.5)

    # (1) Small NCHW image (single-tile dense path), matches the torch branch.
    x1 = jax.random.uniform(jax.random.PRNGKey(0), (2, 3, 16, 16),
                            dtype=jnp.float32)
    y1 = jax.block_until_ready(module(x1))
    assert y1.shape == (2, 1, 16, 16)
    assert jnp.allclose(y1, reference(x1), atol=1e-5, rtol=1e-4)

    # (2) Multi-row-tile dense path with a tail tile (rows=20 -> tiles of 8).
    x2 = jax.random.uniform(jax.random.PRNGKey(1), (1, 3, 128, 160),
                            dtype=jnp.float32)
    y2 = jax.block_until_ready(module(x2))
    assert y2.shape == (1, 1, 128, 160)
    assert jnp.allclose(y2, reference(x2), atol=1e-5, rtol=1e-4)

    # (3) H*W not a multiple of 128 -> flat lane-tiled fallback path.
    x3 = jax.random.uniform(jax.random.PRNGKey(2), (2, 3, 10, 13),
                            dtype=jnp.float32)
    y3 = jax.block_until_ready(module(x3))
    assert y3.shape == (2, 1, 10, 13)
    assert jnp.allclose(y3, reference(x3), atol=1e-5, rtol=1e-4)

    print("KERNEL_OK")
</pallas_src>

<mosaic_0001>
module attributes {stable_mosaic.version = 11 : i64} {
  func.func @_bam_kernel(%arg0: i32, %arg1: i32, %arg2: memref<1x3x1x256xf32, #tpu.memory_space<vmem>>, %arg3: memref<1x1x1x256xf32, #tpu.memory_space<vmem>>) attributes {dimension_semantics = [#tpu.dimension_semantics<parallel>, #tpu.dimension_semantics<parallel>], iteration_bounds = array<i64: 2, 1>, scalar_prefetch = 0 : i64, scratch_operands = 0 : i64, tpu.core_type = #tpu.core_type<tc>, window_params = [{transform_indices = @transform_0, window_bounds = array<i64: 1, 3, 1, 256>}, {transform_indices = @transform_1, window_bounds = array<i64: 1, 1, 1, 256>}]} {
    %c0 = arith.constant 0 : index
    %c0_0 = arith.constant 0 : index
    %c0_1 = arith.constant 0 : index
    %c0_2 = arith.constant 0 : index
    %0 = vector.load %arg2[%c0, %c0_0, %c0_1, %c0_2] : memref<1x3x1x256xf32, #tpu.memory_space<vmem>>, vector<1x3x1x256xf32>
    %cst = arith.constant dense<0xFF800000> : vector<1x1x256xf32>
    %1 = vector.multi_reduction <maximumf>, %0, %cst [1] : vector<1x3x1x256xf32> to vector<1x1x256xf32>
    %2 = vector.shape_cast %1 : vector<1x1x256xf32> to vector<1x1x1x256xf32>
    %cst_3 = arith.constant 1.000000e+00 : f32
    %3 = vector.broadcast %cst_3 : f32 to vector<1x1x1x256xf32>
    %4 = arith.subf %3, %2 : vector<1x1x1x256xf32>
    %cst_4 = arith.constant 0.000000e+00 : f32
    %5 = vector.broadcast %cst_4 : f32 to vector<1x1x1x256xf32>
    %6 = arith.maximumf %4, %5 : vector<1x1x1x256xf32>
    %7 = arith.mulf %6, %6 : vector<1x1x1x256xf32>
    %8 = math.sqrt %6 : vector<1x1x1x256xf32>
    %9 = arith.mulf %7, %8 : vector<1x1x1x256xf32>
    %c0_5 = arith.constant 0 : index
    %c0_6 = arith.constant 0 : index
    %c0_7 = arith.constant 0 : index
    %c0_8 = arith.constant 0 : index
    %10 = vector.load %arg3[%c0_5, %c0_6, %c0_7, %c0_8] : memref<1x1x1x256xf32, #tpu.memory_space<vmem>>, vector<1x1x1x256xf32>
    tpu.vector_store %arg3[%c0_5, %c0_6, %c0_7, %c0_8], %9 {strides = array<i32>} : memref<1x1x1x256xf32, #tpu.memory_space<vmem>>, vector<1x1x1x256xf32>,
    return
  }
  func.func @transform_0(%arg0: i32, %arg1: i32) -> (i32, i32, i32, i32) {
    %c0_i32 = arith.constant 0 : i32
    %c0_i32_0 = arith.constant 0 : i32
    %c0_i32_1 = arith.constant 0 : i32
    return %arg0, %c0_i32, %arg1, %c0_i32_0 : i32, i32, i32, i32
  }
  func.func @transform_1(%arg0: i32, %arg1: i32) -> (i32, i32, i32, i32) {
    %c0_i32 = arith.constant 0 : i32
    %c0_i32_0 = arith.constant 0 : i32
    %c0_i32_1 = arith.constant 0 : i32
    return %arg0, %c0_i32, %arg1, %c0_i32_0 : i32, i32, i32, i32
  }
}

</mosaic_0001>

<llo_original>
// kernel: tpu_custom_call.1
$region0: #{tpu_custom_call.1}
  #allocation0 [shape = 'u32[]', space=smem, size = 0x4, offset = 0x4, fixed_abs, tag = 'smem constant byte address 0x4 - core index']
  #allocation1 [shape = 'u32[144,128]{1,0:T(1,128)}', space=vmem, size = 0x12000, scoped, tag = 'internal scratch']
  %s0 = inlined_call_operand.hbm [shape: f32[2,3,1,256], index: 0, kind: input, shape index: {}]
  %s1 = inlined_call_operand.hbm [shape: f32[2,1,1,256], index: 1, kind: output, shape index: {}]
  %s2 = sld [smem:[#allocation0]]
  $region41: #{tpu_custom_call.1} parent=0
    _
  %s4 = ssub.s32 1, %s2
  %s5 = scalar_select 0, %s4, %s2
  $region1: #{tpu_custom_call.1} parent=0
    #allocation2 [shape = 'u8[6144]{0}', space=vmem, size = 0x1800, scoped, tag = 'input window, operand 0']
    #allocation3 [shape = 's32[2]{0}', space=sflag, size = 0x8, scoped, tag = 'scoped memory for tpu_custom_call.1']
    #allocation4 [shape = 's32[2]{0}', space=sflag, size = 0x8, scoped, tag = 'scoped memory for tpu_custom_call.1']
    #allocation5 [shape = 'u8[2048]{0}', space=vmem, size = 0x800, scoped, tag = 'output window, operand 0']
    %6 = vsyncpa [#allocation3], 0
    %s7 = scalar_lea.sflag [#allocation3], 1
    %8 = vsyncpa %s7, 0
    %9 = vsyncpa [#allocation4], 0
    %s10 = scalar_lea.sflag [#allocation4], 1
    %11 = vsyncpa %s10, 0
    loop: start=0, step=1, limit=4
    $region2: #{tpu_custom_call.1} parent=1 // loop_pre_header
      _
    $region3: #{tpu_custom_call.1} parent=1 // loop_header
      %s13 = sphi 0, %s17
      %p14 = scmp.ge.s32.totalorder %s13, 4
      %s20 = sphi 0, %s32
      %s21 = sphi 0, %s28
      %s22 = sphi 0, %s20
      %s23 = sphi 0, %s21
      %s24 = sphi 0, %s22
      %s25 = sphi 0, %s23
      %s37 = sphi 0, %s39
      %s40 = sphi 0, %s37
      %s41 = sphi 0, %s40
      %s57 = sphi 0, %s41
      %s65 = sphi 0, %s67
      %s68 = sphi 0, %s65
      %s69 = sphi 0, %s68
      %s85 = sphi 0, %s69
    $region4: #{tpu_custom_call.1} parent=1 // loop_header_branch
      %16 = sbr.rel (%p14) target = $region8
    $region5: #{tpu_custom_call.1} parent=1 // loop_body
      %s18 = ssub.s32 %s13, 1
      %s19 = ssub.s32 %s13, 2
      %s26 = sadd.s32 1, %s21
      %p27 = scmp.ge.s32.totalorder %s26, 1
      %s28 = scalar_select %p27, 0, %s26
      %s29 = sadd.s32 1, %s20
      %s30 = scalar_select %p27, %s29, %s20
      %p31 = scmp.ge.s32.totalorder %s30, 2
      %s32 = scalar_select %p31, 0, %s30
      %s33 = ssub.s32 %s20, %s32
      %s34 = ssub.s32 %s21, %s28
      %s35 = sor.u32 %s33, %s34
      %p36 = scmp.eq.s32.totalorder %s35, 0
      %s38 = sadd.s32 %s37, 1
      %s39 = scalar_select %p36, %s37, %s38
      %p42 = pneg %p36
      %p43 = scmp.eq.s32.totalorder %s13, 1
      %p44 = por %p42, %p43
      %p45 = scmp.ne.s32.totalorder %s37, %s40
      %p46 = scmp.eq.s32.totalorder %s13, 0
      %p47 = por %p45, %p46
      %p48 = scmp.ne.s32.totalorder %s37, %s40
      %p49 = scmp.eq.s32.totalorder %s18, 1
      %p50 = por %p48, %p49
      %p51 = scmp.ne.s32.totalorder %s40, %s41
      %p52 = scmp.eq.s32.totalorder %s18, 0
      %p53 = por %p51, %p52
      %p54 = scmp.ne.s32.totalorder %s40, %s41
      %p55 = scmp.eq.s32.totalorder %s19, 1
      %p56 = por %p54, %p55
      %p58 = scmp.ne.s32.totalorder %s41, %s57
      %p59 = scmp.eq.s32.totalorder %s19, 0
      %p60 = por %p58, %p59
      %s61 = ssub.s32 %s20, %s32
      %s62 = ssub.s32 %s21, %s28
      %s63 = sor.u32 %s61, %s62
      %p64 = scmp.eq.s32.totalorder %s63, 0
      %s66 = sadd.s32 %s65, 1
      %s67 = scalar_select %p64, %s65, %s66
      %p70 = pneg %p64
      %p71 = scmp.eq.s32.totalorder %s13, 1
      %p72 = por %p70, %p71
      %p73 = scmp.ne.s32.totalorder %s65, %s68
      %p74 = scmp.eq.s32.totalorder %s13, 0
      %p75 = por %p73, %p74
      %p76 = scmp.ne.s32.totalorder %s65, %s68
      %p77 = scmp.eq.s32.totalorder %s18, 1
      %p78 = por %p76, %p77
      %p79 = scmp.ne.s32.totalorder %s68, %s69
      %p80 = scmp.eq.s32.totalorder %s18, 0
      %p81 = por %p79, %p80
      %p82 = scmp.ne.s32.totalorder %s68, %s69
      %p83 = scmp.eq.s32.totalorder %s19, 1
      %p84 = por %p82, %p83
      %p86 = scmp.ne.s32.totalorder %s69, %s85
      %p87 = scmp.eq.s32.totalorder %s19, 0
      %p88 = por %p86, %p87
      %p89 = scmp.le.s32.totalorder 1, %s13
      %p90 = scmp.lt.s32.totalorder %s13, 3
      %p91 = pnand %p89, %p90
      %p92 = pneg %p91
      // Predicated region
      $region9: #{tpu_custom_call.1} parent=5 // pred_check
        _
      $region10: #{tpu_custom_call.1} parent=5 // pred_check_branch
        %94 = sbr.rel (%p91) target = $region12
      $region11: #{tpu_custom_call.1} parent=5 // pred_region
        %s95 = ssub.s32 %s13, 1
      $region12: #{tpu_custom_call.1} parent=5 // pred_fallthru
        _
      %p96 = scmp.lt.s32.totalorder %s13, 2
      // Predicated region
      $region13: #{tpu_custom_call.1} parent=5 // pred_check
        %p97 = pneg %p96
      $region14: #{tpu_custom_call.1} parent=5 // pred_check_branch
        %99 = sbr.rel (%p97) target = $region16
      $region15: #{tpu_custom_call.1} parent=5 // pred_region
        // Predicated region
        $region17: #{tpu_custom_call.1} parent=15 // pred_check
          %p100 = pneg %p47
        $region18: #{tpu_custom_call.1} parent=15 // pred_check_branch
          %102 = sbr.rel (%p100) target = $region20
        $region19: #{tpu_custom_call.1} parent=15 // pred_region
          %s103 = sand.u32 %s37, 1
          %s104 = scalar_lea.sflag [#allocation3], %s103
          %s105 = sand.u32 %s37, 1
          %s106 = smul.addr %s105, 6
          %s107 = scalar_lea.vmem [#allocation2], %s106
          %s109 = ssub.s32 96, 96
          %110 = vsyncadd %s104, %s109
          %s111 = smul.addr %s21, 2
          %s112 = smul.addr %s20, 6
          %s113 = sadd.s32 %s111, %s112
          %s114 = smul.addr %s113, 16
          %s115 = scalar_lea.hbm %s0, %s114
          %s116 = sshll.u32 %s107, 4
          %s117 = int_to_ptr.vmem [resolvable:$true] %s116
          %122 = dma.hbm_to_vmem [thread:$0]  %s115, 96, %s117, %s104, 32, 32, 2
        $region20: #{tpu_custom_call.1} parent=15 // pred_fallthru
          _
      $region16: #{tpu_custom_call.1} parent=5 // pred_fallthru
        _
      %p123 = scmp.le.s32.totalorder 1, %s13
      %p124 = scmp.lt.s32.totalorder %s13, 3
      %p125 = pnand %p123, %p124
      %p126 = pneg %p125
      // Predicated region
      $region21: #{tpu_custom_call.1} parent=5 // pred_check
        _
      $region22: #{tpu_custom_call.1} parent=5 // pred_check_branch
        %128 = sbr.rel (%p125) target = $region24
      $region23: #{tpu_custom_call.1} parent=5 // pred_region
        %s129 = ssub.s32 %s13, 1
        %s130 = sand.u32 %s40, 1
        %s131 = scalar_lea.sflag [#allocation3], %s130
        %s132 = sand.u32 %s40, 1
        %s133 = smul.addr %s132, 6
        %s134 = scalar_lea.vmem [#allocation2], %s133
        // Predicated region
        $region25: #{tpu_custom_call.1} parent=23 // pred_check
          %p135 = pneg %p53
        $region26: #{tpu_custom_call.1} parent=23 // pred_check_branch
          %137 = sbr.rel (%p135) target = $region28
        $region27: #{tpu_custom_call.1} parent=23 // pred_region
          %138 = dma.done %s131, 96
        $region28: #{tpu_custom_call.1} parent=23 // pred_fallthru
          _
        %s139 = sand.u32 %s40, 1
        %s140 = scalar_lea.sflag [#allocation3], %s139
        %s141 = sand.u32 %s40, 1
        %s142 = smul.addr %s141, 6
        %s143 = scalar_lea.vmem [#allocation2], %s142
        %p144 = pneg %p53
        %p145 = pneg %p50
        %p146 = pneg %p81
        %p147 = pneg %p78
        %s148 = sand.u32 %s68, 1
        %s149 = scalar_lea.sflag [#allocation4], %s148
        %s150 = sand.u32 %s68, 1
        %s151 = smul.addr %s150, 2
        %s152 = scalar_lea.vmem [#allocation5], %s151
        %v153 = vld [vmem:[%s134] sm:$0x3]
        %v154 = vld [vmem:[%s134 + $0x2] sm:$0x3]
        %v155 = vld [vmem:[%s134 + $0x4] sm:$0x3]
        %v156 = vlaneseq
        %vm157 = vcmp.ge.s32.totalorder %v156, 0
        %vm158 = vcmp.lt.s32.totalorder %v156, 256
        %vm159 = vmand %vm157, %vm158
        %v160 = vsel %vm159, %v153, -inf
        %v161 = vsel %vm159, %v154, -inf
        %v162 = vsel %vm159, %v155, -inf
        %v163 = vmax.f32 %v160, %v161
        %v164 = vmax.f32 %v163, %v162
        %v165 = vsub.f32 1.0, %v164
        %v166 = vmax.f32 %v165, 0.0
        %v167 = vmul.f32 %v166, %v166
        %v168 = vrsqrt.pop %v166
        %v169 = vmul.f32 %v166, %v168
        %vm170 = vcmp.eq.f32.partialorder %v166, inf
        %v171 = vsel %vm170, %v166, %v169
        %vm172 = vcmp.eq.f32.partialorder %v166, 0.0
        %v173 = vand.u32 %v166, 2147483648
        %v174 = vsel %vm172, %v173, %v171
        %v175 = vmul.f32 %v167, %v174
        %176 = vst.msk [vmem:[%s152] sm:$0x3] %vm159, %v175
        %s177 = sand.u32 %s68, 1
        %s178 = scalar_lea.sflag [#allocation4], %s177
        %s179 = sand.u32 %s68, 1
        %s180 = smul.addr %s179, 2
        %s181 = scalar_lea.vmem [#allocation5], %s180
        // Predicated region
        $region29: #{tpu_custom_call.1} parent=23 // pred_check
          %p182 = pneg %p78
        $region30: #{tpu_custom_call.1} parent=23 // pred_check_branch
          %184 = sbr.rel (%p182) target = $region32
        $region31: #{tpu_custom_call.1} parent=23 // pred_region
          %s186 = ssub.s32 32, 32
          %187 = vsyncadd %s178, %s186
          %s188 = smul.addr %s23, 2
          %s189 = smul.addr %s22, 2
          %s190 = sadd.s32 %s188, %s189
          %s191 = smul.addr %s190, 16
          %s192 = scalar_lea.hbm %s1, %s191
          %s194 = sshll.u32 %s181, 4
          %s195 = int_to_ptr.vmem [resolvable:$true] %s194
          %197 = dma.vmem_to_hbm [thread:$0]  %s195, 32, %s192, %s178
        $region32: #{tpu_custom_call.1} parent=23 // pred_fallthru
          _
      $region24: #{tpu_custom_call.1} parent=5 // pred_fallthru
        _
      %p198 = scmp.le.s32.totalorder 2, %s13
      // Predicated region
      $region33: #{tpu_custom_call.1} parent=5 // pred_check
        %p199 = pneg %p198
      $region34: #{tpu_custom_call.1} parent=5 // pred_check_branch
        %201 = sbr.rel (%p199) target = $region36
      $region35: #{tpu_custom_call.1} parent=5 // pred_region
        %s202 = ssub.s32 %s13, 2
        // Predicated region
        $region37: #{tpu_custom_call.1} parent=35 // pred_check
          %p203 = pneg %p84
        $region38: #{tpu_custom_call.1} parent=35 // pred_check_branch
          %205 = sbr.rel (%p203) target = $region40
        $region39: #{tpu_custom_call.1} parent=35 // pred_region
          %s206 = sand.u32 %s69, 1
          %s207 = scalar_lea.sflag [#allocation4], %s206
          %s208 = sand.u32 %s69, 1
          %s209 = smul.addr %s208, 2
          %s210 = scalar_lea.vmem [#allocation5], %s209
          %211 = dma.done %s207, 32
        $region40: #{tpu_custom_call.1} parent=35 // pred_fallthru
          _
      $region36: #{tpu_custom_call.1} parent=5 // pred_fallthru
        _
    $region6: #{tpu_custom_call.1} parent=1 // loop_footer
      %s17 = sadd.s32 1, %s13
    $region7: #{tpu_custom_call.1} parent=1 // loop_footer_branch
      %12 = sbr.rel target = $region3
    $region8: #{tpu_custom_call.1} parent=1 // loop_exit
      _
    %212 = vsyncpa [#allocation3], 1
    %s213 = scalar_lea.sflag [#allocation3], 1
    %214 = vsyncpa %s213, 1
    %215 = vsyncpa [#allocation4], 1
    %s216 = scalar_lea.sflag [#allocation4], 1
    %217 = vsyncpa %s216, 1

</llo_original>
